<compile_context>
chip_gen: v5e
topology: v5e:2x2
jax: 0.10.0
libtpu: 0.0.40
codegen_flags: <defaults>
</compile_context>

<pallas_src>
import jax
import jax.numpy as jnp
from jax import lax
from jax.experimental import pallas as pl
from jax.experimental.pallas import tpu as pltpu


def _netvlad_kernel(x_ref, w_ref, b_ref, c_ref, o_ref):
    # x_ref: (Bb, L, D)  w_ref: (D, K)  b_ref: (1, K)  c_ref: (K, D)
    # o_ref: (Bb, K*D)   -- lane-dense output (K*D == 128 for D=32, K=4)
    Bb, L, D = x_ref.shape
    K = w_ref.shape[1]

    x = x_ref[...]                                              # (Bb, L, D) f32

    # ---- soft assignment: single MXU contraction + softmax over K (f32) ----
    logits = jnp.einsum('bld,dk->blk', x, w_ref[...],
                        preferred_element_type=jnp.float32)     # (Bb, L, K)
    logits = logits + b_ref[...]                                # (1,K) broadcast
    logits = logits - jnp.max(logits, axis=-1, keepdims=True)
    e = jnp.exp(logits)
    denom = jnp.sum(e, axis=-1, keepdims=True)
    soft = e * pl.reciprocal(denom, approx=True)                # (Bb, L, K)

    # ---- VLAD aggregation, statically unrolled over K (VPU mul + L reduce) ----
    # vlad[b,k,:] = sum_l soft[b,l,k] * x[b,l,:] - (sum_l soft[b,l,k]) * c[k,:]
    c = c_ref[...]                                              # (K, D)
    chunks = []
    for k in range(K):                                          # K is tiny & static
        w_k = soft[:, :, k:k + 1]                               # (Bb, L, 1)
        agg_k = jnp.sum(w_k * x, axis=1)                        # (Bb, D)
        a_k = jnp.sum(w_k, axis=1)                              # (Bb, 1)
        vlad_k = agg_k - a_k * c[k:k + 1, :]                    # (Bb, D)
        # intra-normalization per cluster (rsqrt on the EUP)
        ss_k = jnp.sum(vlad_k * vlad_k, axis=-1, keepdims=True)
        chunks.append(vlad_k * lax.rsqrt(ss_k + 1e-12))

    # Assemble the lane-dense (Bb, K*D) row directly (single lane concat),
    # then one global L2 (NetVLAD global norm + encoder-level l2norm fused).
    flat = jnp.concatenate(chunks, axis=-1)                     # (Bb, 128)
    g_ss = jnp.sum(flat * flat, axis=-1, keepdims=True)
    o_ref[...] = (flat * lax.rsqrt(g_ss + 1e-12)).astype(o_ref.dtype)


def _pick_block_b(B, cap=512):
    """Captions per grid step.

    Sized for per-step-overhead amortization (~0.5 MB of x per step at the
    cap) under a conservative cross-generation VMEM budget (v7x: 64 MiB).
    The grid is a serial loop on a single TensorCore, so a small batch is
    never split; when B > cap the blocks are balanced and rounded up to a
    sublane multiple so the BlockSpec (8,128) rule holds for every block.
    """
    if B <= cap:
        return B, 1
    grid_b = pl.cdiv(B, cap)
    block_b = pl.cdiv(B, grid_b)
    block_b = ((block_b + 7) // 8) * 8          # sublane multiple
    grid_b = pl.cdiv(B, block_b)
    return block_b, grid_b


def netvlad_txt_encoder(x, assign_w, assign_b, centroids, *, block_b=None):
    """x: (B, L, D) word embeddings; returns (B, K*D) NetVLAD descriptors."""
    B, L, D = x.shape
    K, Dc = centroids.shape
    assert Dc == D

    if block_b is None:
        block_b, grid_b = _pick_block_b(B)
    else:
        grid_b = pl.cdiv(B, block_b)

    # Advisory cost for XLA's scheduler around the custom call.
    flops = 4 * B * L * K * D + 4 * B * K * D
    transcendentals = B * L * K + B * L + B * (K + 1)
    bytes_accessed = (B * L * D + B * K * D + D * K + K + K * D) * 4

    out = pl.pallas_call(
        _netvlad_kernel,
        out_shape=jax.ShapeDtypeStruct((B, K * D), jnp.float32),
        grid_spec=pltpu.PrefetchScalarGridSpec(
            num_scalar_prefetch=0,
            grid=(grid_b,),
            in_specs=[
                pl.BlockSpec((block_b, L, D), lambda b: (b, 0, 0)),  # x
                pl.BlockSpec((D, K), lambda b: (0, 0)),              # assignment W
                pl.BlockSpec((1, K), lambda b: (0, 0)),              # assignment bias
                pl.BlockSpec((K, D), lambda b: (0, 0)),              # centroids
            ],
            out_specs=pl.BlockSpec((block_b, K * D), lambda b: (b, 0)),
        ),
        compiler_params=pltpu.CompilerParams(
            dimension_semantics=("parallel",),
            vmem_limit_bytes=48 * 1024 * 1024),
        cost_estimate=pl.CostEstimate(
            flops=flops,
            transcendentals=transcendentals,
            bytes_accessed=bytes_accessed),
    )(x, assign_w, assign_b, centroids)

    return out   # matches torch .view(B, -1) row-major (K, D) flatten


if __name__ == "__main__":
    # Small shapes consistent with the module:
    #   batch B=2 captions, L=8 words each, w2v ndims D=32, K=4 clusters.
    B, L, D, K = 2, 8, 32, 4

    key = jax.random.PRNGKey(0)
    k_x, k_w, k_b, k_c = jax.random.split(key, 4)

    # "raw_encoding" of captions -> word embeddings (synthetic, deterministic)
    x = jax.random.normal(k_x, (B, L, D), dtype=jnp.float32)

    # NetVLAD parameters (deterministic init)
    assign_w = jax.random.normal(k_w, (D, K), dtype=jnp.float32) * 0.1
    assign_b = jax.random.normal(k_b, (1, K), dtype=jnp.float32) * 0.1
    centroids = jax.random.normal(k_c, (K, D), dtype=jnp.float32)

    out = netvlad_txt_encoder(x, assign_w, assign_b, centroids)
    out = jax.block_until_ready(out)

    assert out.shape == (B, K * D), out.shape
    assert bool(jnp.all(jnp.isfinite(out)))
    print("KERNEL_OK")
</pallas_src>

<mosaic_0001>
module attributes {stable_mosaic.version = 11 : i64} {
  func.func @_netvlad_kernel(%arg0: i32, %arg1: memref<2x8x32xf32, #tpu.memory_space<vmem>>, %arg2: memref<32x4xf32, #tpu.memory_space<vmem>>, %arg3: memref<1x4xf32, #tpu.memory_space<vmem>>, %arg4: memref<4x32xf32, #tpu.memory_space<vmem>>, %arg5: memref<2x128xf32, #tpu.memory_space<vmem>>) attributes {dimension_semantics = [#tpu.dimension_semantics<parallel>], iteration_bounds = array<i64: 1>, scalar_prefetch = 0 : i64, scratch_operands = 0 : i64, tpu.core_type = #tpu.core_type<tc>, window_params = [{transform_indices = @transform_0, window_bounds = array<i64: 2, 8, 32>}, {pipeline_mode = #tpu.pipeline_mode<synchronous>, transform_indices = @transform_1, window_bounds = array<i64: 32, 4>}, {pipeline_mode = #tpu.pipeline_mode<synchronous>, transform_indices = @transform_2, window_bounds = array<i64: 1, 4>}, {pipeline_mode = #tpu.pipeline_mode<synchronous>, transform_indices = @transform_3, window_bounds = array<i64: 4, 32>}, {transform_indices = @transform_4, window_bounds = array<i64: 2, 128>}]} {
    %c0 = arith.constant 0 : index
    %c0_0 = arith.constant 0 : index
    %c0_1 = arith.constant 0 : index
    %0 = vector.load %arg1[%c0, %c0_0, %c0_1] : memref<2x8x32xf32, #tpu.memory_space<vmem>>, vector<2x8x32xf32>
    %c0_2 = arith.constant 0 : index
    %c0_3 = arith.constant 0 : index
    %1 = vector.load %arg2[%c0_2, %c0_3] : memref<32x4xf32, #tpu.memory_space<vmem>>, vector<32x4xf32>
    "tpu.trace_start"() <{level = 10 : i32, message = "bld,dk->blk"}> : () -> ()
    %cst = arith.constant dense<0.000000e+00> : vector<2x8x4xf32>
    %2 = tpu.matmul %0, %1, %cst {dimension_numbers = #tpu.dot_dimension_numbers<[2], [0], [0, 1], [1], [0, 0, 0, 1, 1, 1], [], []>} : vector<2x8x32xf32>, vector<32x4xf32>, vector<2x8x4xf32> -> vector<2x8x4xf32>
    "tpu.trace_stop"() : () -> ()
    %c0_4 = arith.constant 0 : index
    %c0_5 = arith.constant 0 : index
    %3 = vector.load %arg3[%c0_4, %c0_5] : memref<1x4xf32, #tpu.memory_space<vmem>>, vector<1x4xf32>
    %4 = vector.shape_cast %3 : vector<1x4xf32> to vector<1x1x4xf32>
    %5 = vector.broadcast %4 : vector<1x1x4xf32> to vector<2x8x4xf32>
    %6 = arith.addf %2, %5 : vector<2x8x4xf32>
    %cst_6 = arith.constant dense<0xFF800000> : vector<2x8xf32>
    %7 = vector.multi_reduction <maximumf>, %6, %cst_6 [2] : vector<2x8x4xf32> to vector<2x8xf32>
    %8 = vector.shape_cast %7 : vector<2x8xf32> to vector<2x8x1xf32>
    %9 = vector.broadcast %8 : vector<2x8x1xf32> to vector<2x8x4xf32>
    %10 = arith.subf %6, %9 : vector<2x8x4xf32>
    %11 = math.exp %10 : vector<2x8x4xf32>
    %cst_7 = arith.constant dense<0.000000e+00> : vector<2x8xf32>
    %12 = vector.multi_reduction <add>, %11, %cst_7 [2] : vector<2x8x4xf32> to vector<2x8xf32>
    %13 = vector.shape_cast %12 : vector<2x8xf32> to vector<2x8x1xf32>
    %14 = tpu.reciprocal %13 {approx = true} : vector<2x8x1xf32> -> vector<2x8x1xf32>
    %15 = vector.broadcast %14 : vector<2x8x1xf32> to vector<2x8x4xf32>
    %16 = arith.mulf %11, %15 : vector<2x8x4xf32>
    %c0_8 = arith.constant 0 : index
    %c0_9 = arith.constant 0 : index
    %17 = vector.load %arg4[%c0_8, %c0_9] : memref<4x32xf32, #tpu.memory_space<vmem>>, vector<4x32xf32>
    %18 = vector.extract_strided_slice %16 {offsets = [0, 0, 0], sizes = [2, 8, 1], strides = [1, 1, 1]} : vector<2x8x4xf32> to vector<2x8x1xf32>
    %19 = vector.broadcast %18 : vector<2x8x1xf32> to vector<2x8x32xf32>
    %20 = arith.mulf %19, %0 : vector<2x8x32xf32>
    %cst_10 = arith.constant dense<0.000000e+00> : vector<2x32xf32>
    %21 = vector.multi_reduction <add>, %20, %cst_10 [1] : vector<2x8x32xf32> to vector<2x32xf32>
    %cst_11 = arith.constant dense<0.000000e+00> : vector<2x1xf32>
    %22 = vector.multi_reduction <add>, %18, %cst_11 [1] : vector<2x8x1xf32> to vector<2x1xf32>
    %23 = vector.extract_strided_slice %17 {offsets = [0, 0], sizes = [1, 32], strides = [1, 1]} : vector<4x32xf32> to vector<1x32xf32>
    %24 = vector.broadcast %22 : vector<2x1xf32> to vector<2x32xf32>
    %25 = vector.broadcast %23 : vector<1x32xf32> to vector<2x32xf32>
    %26 = arith.mulf %24, %25 : vector<2x32xf32>
    %27 = arith.subf %21, %26 : vector<2x32xf32>
    %28 = arith.mulf %27, %27 : vector<2x32xf32>
    %cst_12 = arith.constant dense<0.000000e+00> : vector<2xf32>
    %29 = vector.multi_reduction <add>, %28, %cst_12 [1] : vector<2x32xf32> to vector<2xf32>
    %30 = vector.shape_cast %29 : vector<2xf32> to vector<2x1xf32>
    %cst_13 = arith.constant 9.99999996E-13 : f32
    %31 = vector.broadcast %cst_13 : f32 to vector<2x1xf32>
    %32 = arith.addf %30, %31 : vector<2x1xf32>
    %33 = math.rsqrt %32 : vector<2x1xf32>
    %34 = vector.broadcast %33 : vector<2x1xf32> to vector<2x32xf32>
    %35 = arith.mulf %27, %34 : vector<2x32xf32>
    %36 = vector.extract_strided_slice %16 {offsets = [0, 0, 1], sizes = [2, 8, 1], strides = [1, 1, 1]} : vector<2x8x4xf32> to vector<2x8x1xf32>
    %37 = vector.broadcast %36 : vector<2x8x1xf32> to vector<2x8x32xf32>
    %38 = arith.mulf %37, %0 : vector<2x8x32xf32>
    %cst_14 = arith.constant dense<0.000000e+00> : vector<2x32xf32>
    %39 = vector.multi_reduction <add>, %38, %cst_14 [1] : vector<2x8x32xf32> to vector<2x32xf32>
    %cst_15 = arith.constant dense<0.000000e+00> : vector<2x1xf32>
    %40 = vector.multi_reduction <add>, %36, %cst_15 [1] : vector<2x8x1xf32> to vector<2x1xf32>
    %41 = vector.extract_strided_slice %17 {offsets = [1, 0], sizes = [1, 32], strides = [1, 1]} : vector<4x32xf32> to vector<1x32xf32>
    %42 = vector.broadcast %40 : vector<2x1xf32> to vector<2x32xf32>
    %43 = vector.broadcast %41 : vector<1x32xf32> to vector<2x32xf32>
    %44 = arith.mulf %42, %43 : vector<2x32xf32>
    %45 = arith.subf %39, %44 : vector<2x32xf32>
    %46 = arith.mulf %45, %45 : vector<2x32xf32>
    %cst_16 = arith.constant dense<0.000000e+00> : vector<2xf32>
    %47 = vector.multi_reduction <add>, %46, %cst_16 [1] : vector<2x32xf32> to vector<2xf32>
    %48 = vector.shape_cast %47 : vector<2xf32> to vector<2x1xf32>
    %cst_17 = arith.constant 9.99999996E-13 : f32
    %49 = vector.broadcast %cst_17 : f32 to vector<2x1xf32>
    %50 = arith.addf %48, %49 : vector<2x1xf32>
    %51 = math.rsqrt %50 : vector<2x1xf32>
    %52 = vector.broadcast %51 : vector<2x1xf32> to vector<2x32xf32>
    %53 = arith.mulf %45, %52 : vector<2x32xf32>
    %54 = vector.extract_strided_slice %16 {offsets = [0, 0, 2], sizes = [2, 8, 1], strides = [1, 1, 1]} : vector<2x8x4xf32> to vector<2x8x1xf32>
    %55 = vector.broadcast %54 : vector<2x8x1xf32> to vector<2x8x32xf32>
    %56 = arith.mulf %55, %0 : vector<2x8x32xf32>
    %cst_18 = arith.constant dense<0.000000e+00> : vector<2x32xf32>
    %57 = vector.multi_reduction <add>, %56, %cst_18 [1] : vector<2x8x32xf32> to vector<2x32xf32>
    %cst_19 = arith.constant dense<0.000000e+00> : vector<2x1xf32>
    %58 = vector.multi_reduction <add>, %54, %cst_19 [1] : vector<2x8x1xf32> to vector<2x1xf32>
    %59 = vector.extract_strided_slice %17 {offsets = [2, 0], sizes = [1, 32], strides = [1, 1]} : vector<4x32xf32> to vector<1x32xf32>
    %60 = vector.broadcast %58 : vector<2x1xf32> to vector<2x32xf32>
    %61 = vector.broadcast %59 : vector<1x32xf32> to vector<2x32xf32>
    %62 = arith.mulf %60, %61 : vector<2x32xf32>
    %63 = arith.subf %57, %62 : vector<2x32xf32>
    %64 = arith.mulf %63, %63 : vector<2x32xf32>
    %cst_20 = arith.constant dense<0.000000e+00> : vector<2xf32>
    %65 = vector.multi_reduction <add>, %64, %cst_20 [1] : vector<2x32xf32> to vector<2xf32>
    %66 = vector.shape_cast %65 : vector<2xf32> to vector<2x1xf32>
    %cst_21 = arith.constant 9.99999996E-13 : f32
    %67 = vector.broadcast %cst_21 : f32 to vector<2x1xf32>
    %68 = arith.addf %66, %67 : vector<2x1xf32>
    %69 = math.rsqrt %68 : vector<2x1xf32>
    %70 = vector.broadcast %69 : vector<2x1xf32> to vector<2x32xf32>
    %71 = arith.mulf %63, %70 : vector<2x32xf32>
    %72 = vector.extract_strided_slice %16 {offsets = [0, 0, 3], sizes = [2, 8, 1], strides = [1, 1, 1]} : vector<2x8x4xf32> to vector<2x8x1xf32>
    %73 = vector.broadcast %72 : vector<2x8x1xf32> to vector<2x8x32xf32>
    %74 = arith.mulf %73, %0 : vector<2x8x32xf32>
    %cst_22 = arith.constant dense<0.000000e+00> : vector<2x32xf32>
    %75 = vector.multi_reduction <add>, %74, %cst_22 [1] : vector<2x8x32xf32> to vector<2x32xf32>
    %cst_23 = arith.constant dense<0.000000e+00> : vector<2x1xf32>
    %76 = vector.multi_reduction <add>, %72, %cst_23 [1] : vector<2x8x1xf32> to vector<2x1xf32>
    %77 = vector.extract_strided_slice %17 {offsets = [3, 0], sizes = [1, 32], strides = [1, 1]} : vector<4x32xf32> to vector<1x32xf32>
    %78 = vector.broadcast %76 : vector<2x1xf32> to vector<2x32xf32>
    %79 = vector.broadcast %77 : vector<1x32xf32> to vector<2x32xf32>
    %80 = arith.mulf %78, %79 : vector<2x32xf32>
    %81 = arith.subf %75, %80 : vector<2x32xf32>
    %82 = arith.mulf %81, %81 : vector<2x32xf32>
    %cst_24 = arith.constant dense<0.000000e+00> : vector<2xf32>
    %83 = vector.multi_reduction <add>, %82, %cst_24 [1] : vector<2x32xf32> to vector<2xf32>
    %84 = vector.shape_cast %83 : vector<2xf32> to vector<2x1xf32>
    %cst_25 = arith.constant 9.99999996E-13 : f32
    %85 = vector.broadcast %cst_25 : f32 to vector<2x1xf32>
    %86 = arith.addf %84, %85 : vector<2x1xf32>
    %87 = math.rsqrt %86 : vector<2x1xf32>
    %88 = vector.broadcast %87 : vector<2x1xf32> to vector<2x32xf32>
    %89 = arith.mulf %81, %88 : vector<2x32xf32>
    %90 = tpu.concatenate %35, %53, %71, %89 in 1 : vector<2x32xf32>, vector<2x32xf32>, vector<2x32xf32>, vector<2x32xf32> -> vector<2x128xf32>
    %91 = arith.mulf %90, %90 : vector<2x128xf32>
    %cst_26 = arith.constant dense<0.000000e+00> : vector<2xf32>
    %92 = vector.multi_reduction <add>, %91, %cst_26 [1] : vector<2x128xf32> to vector<2xf32>
    %93 = vector.shape_cast %92 : vector<2xf32> to vector<2x1xf32>
    %cst_27 = arith.constant 9.99999996E-13 : f32
    %94 = vector.broadcast %cst_27 : f32 to vector<2x1xf32>
    %95 = arith.addf %93, %94 : vector<2x1xf32>
    %96 = math.rsqrt %95 : vector<2x1xf32>
    %97 = vector.broadcast %96 : vector<2x1xf32> to vector<2x128xf32>
    %98 = arith.mulf %90, %97 : vector<2x128xf32>
    %c0_28 = arith.constant 0 : index
    %c0_29 = arith.constant 0 : index
    %99 = vector.load %arg5[%c0_28, %c0_29] : memref<2x128xf32, #tpu.memory_space<vmem>>, vector<2x128xf32>
    tpu.vector_store %arg5[%c0_28, %c0_29], %98 {strides = array<i32>} : memref<2x128xf32, #tpu.memory_space<vmem>>, vector<2x128xf32>,
    return
  }
  func.func @transform_0(%arg0: i32) -> (i32, i32, i32) {
    %c0_i32 = arith.constant 0 : i32
    %c0_i32_0 = arith.constant 0 : i32
    %c0_i32_1 = arith.constant 0 : i32
    return %arg0, %c0_i32, %c0_i32_0 : i32, i32, i32
  }
  func.func @transform_1(%arg0: i32) -> (i32, i32) {
    %c0_i32 = arith.constant 0 : i32
    %c0_i32_0 = arith.constant 0 : i32
    %c0_i32_1 = arith.constant 0 : i32
    return %c0_i32, %c0_i32_0 : i32, i32
  }
  func.func @transform_2(%arg0: i32) -> (i32, i32) {
    %c0_i32 = arith.constant 0 : i32
    %c0_i32_0 = arith.constant 0 : i32
    %c0_i32_1 = arith.constant 0 : i32
    return %c0_i32, %c0_i32_0 : i32, i32
  }
  func.func @transform_3(%arg0: i32) -> (i32, i32) {
    %c0_i32 = arith.constant 0 : i32
    %c0_i32_0 = arith.constant 0 : i32
    %c0_i32_1 = arith.constant 0 : i32
    return %c0_i32, %c0_i32_0 : i32, i32
  }
  func.func @transform_4(%arg0: i32) -> (i32, i32) {
    %c0_i32 = arith.constant 0 : i32
    %c0_i32_0 = arith.constant 0 : i32
    return %arg0, %c0_i32 : i32, i32
  }
}

</mosaic_0001>

<llo_original>
// kernel: tpu_custom_call.1
$region0: #{tpu_custom_call.1}
  #allocation0 [shape = 'u32[]', space=smem, size = 0x4, offset = 0x4, fixed_abs, tag = 'smem constant byte address 0x4 - core index']
  #allocation1 [shape = 'u32[72,128]{1,0:T(1,128)}', space=vmem, size = 0x9000, scoped, tag = 'internal scratch']
  %s0 = inlined_call_operand.vmem [shape: f32[2,8,32], index: 0, kind: input, shape index: {}]
  %s1 = inlined_call_operand.vmem [shape: f32[32,4], index: 1, kind: input, shape index: {}]
  %s2 = inlined_call_operand.vmem [shape: f32[1,4], index: 2, kind: input, shape index: {}]
  %s3 = inlined_call_operand.vmem [shape: f32[4,32], index: 3, kind: input, shape index: {}]
  %s4 = inlined_call_operand.hbm [shape: f32[2,128], index: 4, kind: output, shape index: {}]
  %s5 = sld [smem:[#allocation0]]
  $region26: #{tpu_custom_call.1} parent=0
    _
  %s7 = ssub.s32 1, %s5
  %s8 = scalar_select 0, %s7, %s5
  $region1: #{tpu_custom_call.1} parent=0
    #allocation2 [shape = 'u8[1024]{0}', space=vmem, size = 0x400, scoped, tag = 'output window, operand 0, single buffered']
    #allocation3 [shape = 's32[1]{0}', space=sflag, size = 0x4, scoped, tag = 'scoped memory for tpu_custom_call.1']
    %9 = vsyncpa [#allocation3], 0
    // Predicated region
    $region2: #{tpu_custom_call.1} parent=1 // pred_check
      _
    $region3: #{tpu_custom_call.1} parent=1 // pred_check_branch
      %11 = sbr.rel (0) target = $region5
    $region4: #{tpu_custom_call.1} parent=1 // pred_region
      _
    $region5: #{tpu_custom_call.1} parent=1 // pred_fallthru
      _
    // Predicated region
    $region6: #{tpu_custom_call.1} parent=1 // pred_check
      _
    $region7: #{tpu_custom_call.1} parent=1 // pred_check_branch
      %13 = sbr.rel (0) target = $region9
    $region8: #{tpu_custom_call.1} parent=1 // pred_region
      _
    $region9: #{tpu_custom_call.1} parent=1 // pred_fallthru
      _
    // Predicated region
    $region10: #{tpu_custom_call.1} parent=1 // pred_check
      _
    $region11: #{tpu_custom_call.1} parent=1 // pred_check_branch
      %15 = sbr.rel (0) target = $region13
    $region12: #{tpu_custom_call.1} parent=1 // pred_region
      _
    $region13: #{tpu_custom_call.1} parent=1 // pred_fallthru
      _
    // Predicated region
    $region14: #{tpu_custom_call.1} parent=1 // pred_check
      _
    $region15: #{tpu_custom_call.1} parent=1 // pred_check_branch
      %17 = sbr.rel (0) target = $region17
    $region16: #{tpu_custom_call.1} parent=1 // pred_region
      _
    $region17: #{tpu_custom_call.1} parent=1 // pred_fallthru
      _
    %v18 = vld [vmem:[%s0] sm:$0xff]
    %v19 = vld [vmem:[%s0 + $0x8] sm:$0xff]
    %v20 = vld [vmem:[%s1] sm:$0xff]
    %v21 = vld [vmem:[%s1 + $0x8] sm:$0xff]
    %v22 = vld [vmem:[%s1 + $0x10] sm:$0xff]
    %v23 = vld [vmem:[%s1 + $0x18] sm:$0xff]
    %v24 = vld [vmem:[%s2] sm:$0x1]
    %v26 = vperm.slane %v24, 0
    %vm28 = vcmask 261120
    %v30 = vsel %vm28, %v18, 0
    %v33 = vsel %vm28, %v19, 0
    %35 = vmatpush.msra.mxu0 0.0
    %36 = vmatpush.msra.mxu0 0.0
    %37 = vmatpush.msra.mxu0 0.0
    %38 = vmatpush.msra.mxu0 0.0
    %39 = vmatpush.msra.mxu0 0.0
    %40 = vmatpush.msra.mxu0 0.0
    %41 = vmatpush.msra.mxu0 0.0
    %42 = vmatpush.msra.mxu0 0.0
    %43 = vmatpush.msra.mxu0 0.0
    %44 = vmatpush.msra.mxu0 0.0
    %45 = vmatpush.msra.mxu0 0.0
    %46 = vmatpush.msra.mxu0 0.0
    %47 = vmatpush.msra.mxu0 %v23
    %48 = vmatpush.msra.mxu0 %v22
    %49 = vmatpush.msra.mxu0 %v21
    %50 = vmatpush.msra.mxu0 %v20
    %51 = vmatmul.f32.gmra.mxu0 %v30
    %v52 = vpop.f32.mrf.mxu0
    %v53 = vadd.f32 %v26, %v52
    %54 = vmatmul.f32.gmra.mxu0 %v33
    %v55 = vpop.f32.mrf.mxu0
    %v56 = vadd.f32 %v26, %v55
    %57 = vdwg.mxu0
    %vm58 = vcmask 31744
    %v59 = vsel %vm58, %v53, -inf
    %60 = vmax.xlane.f32.xlu0 %v59
    %v61 = vpop.xlane.xlu0 %60
    %v62 = vsel %vm58, %v56, -inf
    %63 = vmax.xlane.f32.xlu0 %v62
    %v64 = vpop.xlane.xlu0 %63
    %v65 = vsub.f32 %v53, %v61
    %v66 = vsub.f32 %v56, %v64
    %v67 = vmul.f32 %v65, 1.442695
    %v68 = vpow.pop %v67
    %v69 = vmul.f32 %v66, 1.442695
    %v70 = vpow.pop %v69
    %v71 = vsel %vm58, %v68, 0.0
    %72 = vadd.xlane.f32.xlu0 %v71
    %v73 = vpop.xlane.xlu0 %72
    %v74 = vsel %vm58, %v70, 0.0
    %75 = vadd.xlane.f32.xlu0 %v74
    %v76 = vpop.xlane.xlu0 %75
    %v77 = vrcp.pop %v73
    %v78 = vrcp.pop %v76
    %v79 = vmul.f32 %v68, %v77
    %v80 = vmul.f32 %v70, %v78
    %v81 = vld [vmem:[%s3] sm:$0xf]
    %83 = vset.pattern.permute.xlu0 0
    %84 = vperm.xlu0 %83, %v79
    %v85 = vpop.permute.xlu0 %84
    %88 = vset.pattern.permute.xlu0 0
    %89 = vperm.xlu0 %88, %v80
    %v90 = vpop.permute.xlu0 %89
    %v92 = vmul.f32 %v85, %v18
    %v93 = vmul.f32 %v90, %v19
    %v94 = vsel %vm28, %v92, 0.0
    %v95 = vrot.slane %v94, 4
    %v96 = vadd.f32 %v94, %v95
    %v97 = vrot.slane %v96, 2
    %v98 = vadd.f32 %v96, %v97
    %v99 = vrot.slane %v98, 1
    %v100 = vadd.f32 %v98, %v99
    %v101 = vsel %vm28, %v93, 0.0
    %v102 = vrot.slane %v101, 4
    %v103 = vadd.f32 %v101, %v102
    %v104 = vrot.slane %v103, 2
    %v105 = vadd.f32 %v103, %v104
    %v106 = vrot.slane %v105, 1
    %v107 = vadd.f32 %v105, %v106
    %vm108 = vcmask 7168
    %v109 = vsel %vm108, %v79, 0.0
    %v110 = vrot.slane %v109, 4
    %v111 = vadd.f32 %v109, %v110
    %v112 = vrot.slane %v111, 2
    %v113 = vadd.f32 %v111, %v112
    %v114 = vrot.slane %v113, 1
    %v115 = vadd.f32 %v113, %v114
    %v116 = vsel %vm108, %v80, 0.0
    %v117 = vrot.slane %v116, 4
    %v118 = vadd.f32 %v116, %v117
    %v119 = vrot.slane %v118, 2
    %v120 = vadd.f32 %v118, %v119
    %v121 = vrot.slane %v120, 1
    %v122 = vadd.f32 %v120, %v121
    %124 = vset.pattern.permute.xlu0 0
    %125 = vperm.xlu0 %124, %v115
    %v126 = vpop.permute.xlu0 %125
    %129 = vset.pattern.permute.xlu0 0
    %130 = vperm.xlu0 %129, %v122
    %v131 = vpop.permute.xlu0 %130
    %v133 = vperm.slane %v81, 0
    %v134 = vmul.f32 %v126, %v133
    %v135 = vmul.f32 %v131, %v133
    %v136 = vsub.f32 %v100, %v134
    %v137 = vsub.f32 %v107, %v135
    %v138 = vmul.f32 %v136, %v136
    %v139 = vmul.f32 %v137, %v137
    %v142 = vrot.slane %v139, 7
    %vm143 = vcmask 1041409
    %v144 = vsel %vm143, %v142, %v138
    %vm146 = vcmask 254976
    %v147 = vsel %vm146, %v144, 0.0
    %148 = vadd.xlane.f32.xlu0 %v147
    %v149 = vpop.xlane.xlu0 %148
    %v150 = vadd.f32 %v149, 1e-12
    %v151 = vrsqrt.pop %v150
    %v152 = vmul.f32 %v151, %v150
    %v153 = vmul.f32 %v152, %v151
    %v154 = vmul.f32 0.5, %v153
    %v155 = vsub.f32 1.5, %v154
    %v156 = vmul.f32 %v151, %v155
    %vm157 = vweird.f32 %v150
    %vm158 = vweird.f32 %v151
    %vm159 = vmor %vm157, %vm158
    %v160 = vsel %vm159, %v151, %v156
    %v162 = vrot.slane %v160, 1
    %v165 = vmul.f32 %v136, %v160
    %v166 = vmul.f32 %v137, %v162
    %167 = vset.pattern.permute.xlu0 1
    %168 = vperm.xlu0 %167, %v79
    %v169 = vpop.permute.xlu0 %168
    %171 = vset.pattern.permute.xlu0 1
    %172 = vperm.xlu0 %171, %v80
    %v173 = vpop.permute.xlu0 %172
    %v175 = vmul.f32 %v169, %v18
    %v176 = vmul.f32 %v173, %v19
    %v177 = vsel %vm28, %v175, 0.0
    %v178 = vrot.slane %v177, 4
    %v179 = vadd.f32 %v177, %v178
    %v180 = vrot.slane %v179, 2
    %v181 = vadd.f32 %v179, %v180
    %v182 = vrot.slane %v181, 1
    %v183 = vadd.f32 %v181, %v182
    %v184 = vsel %vm28, %v176, 0.0
    %v185 = vrot.slane %v184, 4
    %v186 = vadd.f32 %v184, %v185
    %v187 = vrot.slane %v186, 2
    %v188 = vadd.f32 %v186, %v187
    %v189 = vrot.slane %v188, 1
    %v190 = vadd.f32 %v188, %v189
    %vm191 = vcmask 15368
    %v192 = vsel %vm191, %v79, 0.0
    %v193 = vrot.slane %v192, 4
    %v194 = vadd.f32 %v192, %v193
    %v195 = vrot.slane %v194, 2
    %v196 = vadd.f32 %v194, %v195
    %v197 = vrot.slane %v196, 1
    %v198 = vadd.f32 %v196, %v197
    %v199 = vsel %vm191, %v80, 0.0
    %v200 = vrot.slane %v199, 4
    %v201 = vadd.f32 %v199, %v200
    %v202 = vrot.slane %v201, 2
    %v203 = vadd.f32 %v201, %v202
    %v204 = vrot.slane %v203, 1
    %v205 = vadd.f32 %v203, %v204
    %207 = vset.pattern.permute.xlu0 1
    %208 = vperm.xlu0 %207, %v198
    %v209 = vpop.permute.xlu0 %208
    %212 = vset.pattern.permute.xlu0 1
    %213 = vperm.xlu0 %212, %v205
    %v214 = vpop.permute.xlu0 %213
    %v216 = vperm.slane %v81, 1
    %v217 = vmul.f32 %v209, %v216
    %v218 = vmul.f32 %v214, %v216
    %v219 = vsub.f32 %v183, %v217
    %v220 = vsub.f32 %v190, %v218
    %v221 = vmul.f32 %v219, %v219
    %v222 = vmul.f32 %v220, %v220
    %v225 = vrot.slane %v222, 7
    %v226 = vsel %vm143, %v225, %v221
    %v228 = vsel %vm146, %v226, 0.0
    %229 = vadd.xlane.f32.xlu0 %v228
    %v230 = vpop.xlane.xlu0 %229
    %v231 = vadd.f32 %v230, 1e-12
    %v232 = vrsqrt.pop %v231
    %v233 = vmul.f32 %v232, %v231
    %v234 = vmul.f32 %v233, %v232
    %v235 = vmul.f32 0.5, %v234
    %v236 = vsub.f32 1.5, %v235
    %v237 = vmul.f32 %v232, %v236
    %vm238 = vweird.f32 %v231
    %vm239 = vweird.f32 %v232
    %vm240 = vmor %vm238, %vm239
    %v241 = vsel %vm240, %v232, %v237
    %v243 = vrot.slane %v241, 1
    %v246 = vmul.f32 %v219, %v241
    %v247 = vmul.f32 %v220, %v243
    %248 = vset.pattern.permute.xlu0 2
    %249 = vperm.xlu0 %248, %v79
    %v250 = vpop.permute.xlu0 %249
    %252 = vset.pattern.permute.xlu0 2
    %253 = vperm.xlu0 %252, %v80
    %v254 = vpop.permute.xlu0 %253
    %v256 = vmul.f32 %v250, %v18
    %v257 = vmul.f32 %v254, %v19
    %v258 = vsel %vm28, %v256, 0.0
    %v259 = vrot.slane %v258, 4
    %v260 = vadd.f32 %v258, %v259
    %v261 = vrot.slane %v260, 2
    %v262 = vadd.f32 %v260, %v261
    %v263 = vrot.slane %v262, 1
    %v264 = vadd.f32 %v262, %v263
    %v265 = vsel %vm28, %v257, 0.0
    %v266 = vrot.slane %v265, 4
    %v267 = vadd.f32 %v265, %v266
    %v268 = vrot.slane %v267, 2
    %v269 = vadd.f32 %v267, %v268
    %v270 = vrot.slane %v269, 1
    %v271 = vadd.f32 %v269, %v270
    %vm272 = vcmask 23568
    %v273 = vsel %vm272, %v79, 0.0
    %v274 = vrot.slane %v273, 4
    %v275 = vadd.f32 %v273, %v274
    %v276 = vrot.slane %v275, 2
    %v277 = vadd.f32 %v275, %v276
    %v278 = vrot.slane %v277, 1
    %v279 = vadd.f32 %v277, %v278
    %v280 = vsel %vm272, %v80, 0.0
    %v281 = vrot.slane %v280, 4
    %v282 = vadd.f32 %v280, %v281
    %v283 = vrot.slane %v282, 2
    %v284 = vadd.f32 %v282, %v283
    %v285 = vrot.slane %v284, 1
    %v286 = vadd.f32 %v284, %v285
    %288 = vset.pattern.permute.xlu0 2
    %289 = vperm.xlu0 %288, %v279
    %v290 = vpop.permute.xlu0 %289
    %293 = vset.pattern.permute.xlu0 2
    %294 = vperm.xlu0 %293, %v286
    %v295 = vpop.permute.xlu0 %294
    %v297 = vperm.slane %v81, 2
    %v298 = vmul.f32 %v290, %v297
    %v299 = vmul.f32 %v295, %v297
    %v300 = vsub.f32 %v264, %v298
    %v301 = vsub.f32 %v271, %v299
    %v302 = vmul.f32 %v300, %v300
    %v303 = vmul.f32 %v301, %v301
    %v306 = vrot.slane %v303, 7
    %v307 = vsel %vm143, %v306, %v302
    %v309 = vsel %vm146, %v307, 0.0
    %310 = vadd.xlane.f32.xlu0 %v309
    %v311 = vpop.xlane.xlu0 %310
    %v312 = vadd.f32 %v311, 1e-12
    %v313 = vrsqrt.pop %v312
    %v314 = vmul.f32 %v313, %v312
    %v315 = vmul.f32 %v314, %v313
    %v316 = vmul.f32 0.5, %v315
    %v317 = vsub.f32 1.5, %v316
    %v318 = vmul.f32 %v313, %v317
    %vm319 = vweird.f32 %v312
    %vm320 = vweird.f32 %v313
    %vm321 = vmor %vm319, %vm320
    %v322 = vsel %vm321, %v313, %v318
    %v324 = vrot.slane %v322, 1
    %v327 = vmul.f32 %v300, %v322
    %v328 = vmul.f32 %v301, %v324
    %329 = vset.pattern.permute.xlu0 3
    %330 = vperm.xlu0 %329, %v79
    %v331 = vpop.permute.xlu0 %330
    %333 = vset.pattern.permute.xlu0 3
    %334 = vperm.xlu0 %333, %v80
    %v335 = vpop.permute.xlu0 %334
    %v337 = vmul.f32 %v331, %v18
    %v338 = vmul.f32 %v335, %v19
    %v339 = vsel %vm28, %v337, 0.0
    %v340 = vrot.slane %v339, 4
    %v341 = vadd.f32 %v339, %v340
    %v342 = vrot.slane %v341, 2
    %v343 = vadd.f32 %v341, %v342
    %v344 = vrot.slane %v343, 1
    %v345 = vadd.f32 %v343, %v344
    %v346 = vsel %vm28, %v338, 0.0
    %v347 = vrot.slane %v346, 4
    %v348 = vadd.f32 %v346, %v347
    %v349 = vrot.slane %v348, 2
    %v350 = vadd.f32 %v348, %v349
    %v351 = vrot.slane %v350, 1
    %v352 = vadd.f32 %v350, %v351
    %vm353 = vcmask 31768
    %v354 = vsel %vm353, %v79, 0.0
    %v355 = vrot.slane %v354, 4
    %v356 = vadd.f32 %v354, %v355
    %v357 = vrot.slane %v356, 2
    %v358 = vadd.f32 %v356, %v357
    %v359 = vrot.slane %v358, 1
    %v360 = vadd.f32 %v358, %v359
    %v361 = vsel %vm353, %v80, 0.0
    %v362 = vrot.slane %v361, 4
    %v363 = vadd.f32 %v361, %v362
    %v364 = vrot.slane %v363, 2
    %v365 = vadd.f32 %v363, %v364
    %v366 = vrot.slane %v365, 1
    %v367 = vadd.f32 %v365, %v366
    %369 = vset.pattern.permute.xlu0 3
    %370 = vperm.xlu0 %369, %v360
    %v371 = vpop.permute.xlu0 %370
    %374 = vset.pattern.permute.xlu0 3
    %375 = vperm.xlu0 %374, %v367
    %v376 = vpop.permute.xlu0 %375
    %v378 = vperm.slane %v81, 3
    %v379 = vmul.f32 %v371, %v378
    %v380 = vmul.f32 %v376, %v378
    %v381 = vsub.f32 %v345, %v379
    %v382 = vsub.f32 %v352, %v380
    %v383 = vmul.f32 %v381, %v381
    %v384 = vmul.f32 %v382, %v382
    %v387 = vrot.slane %v384, 7
    %v388 = vsel %vm143, %v387, %v383
    %v390 = vsel %vm146, %v388, 0.0
    %391 = vadd.xlane.f32.xlu0 %v390
    %v392 = vpop.xlane.xlu0 %391
    %v393 = vadd.f32 %v392, 1e-12
    %v394 = vrsqrt.pop %v393
    %v395 = vmul.f32 %v394, %v393
    %v396 = vmul.f32 %v395, %v394
    %v397 = vmul.f32 0.5, %v396
    %v398 = vsub.f32 1.5, %v397
    %v399 = vmul.f32 %v394, %v398
    %vm400 = vweird.f32 %v393
    %vm401 = vweird.f32 %v394
    %vm402 = vmor %vm400, %vm401
    %v403 = vsel %vm402, %v394, %v399
    %v405 = vrot.slane %v403, 1
    %v408 = vmul.f32 %v381, %v403
    %v409 = vmul.f32 %v382, %v405
    %v412 = vrot.slane %v166, 7
    %v413 = vsel %vm143, %v412, %v165
    %v417 = vrot.slane %v247, 7
    %v418 = vsel %vm143, %v417, %v246
    %419 = vrot.lane.b32.xlu0 %v418, 32
    %v420 = vpop.permute.xlu0 %419
    %v424 = vrot.slane %v328, 7
    %v425 = vsel %vm143, %v424, %v327
    %426 = vrot.lane.b32.xlu0 %v425, 64
    %v427 = vpop.permute.xlu0 %426
    %v431 = vrot.slane %v409, 7
    %v432 = vsel %vm143, %v431, %v408
    %433 = vrot.lane.b32.xlu0 %v432, 96
    %v434 = vpop.permute.xlu0 %433
    %v436 = vsel %vm28, %v413, %v420
    %vm437 = vcmask 523264
    %v438 = vsel %vm437, %v436, %v427
    %vm439 = vcmask 785408
    %v440 = vsel %vm439, %v438, %v434
    %v441 = vmul.f32 %v440, %v440
    %vm442 = vcmask 1041408
    %v443 = vsel %vm442, %v441, 0.0
    %444 = vadd.xlane.f32.xlu0 %v443
    %v445 = vpop.xlane.xlu0 %444
    %v446 = vadd.f32 %v445, 1e-12
    %v447 = vrsqrt.pop %v446
    %v448 = vmul.f32 %v447, %v446
    %v449 = vmul.f32 %v448, %v447
    %v450 = vmul.f32 0.5, %v449
    %v451 = vsub.f32 1.5, %v450
    %v452 = vmul.f32 %v447, %v451
    %vm453 = vweird.f32 %v446
    %vm454 = vweird.f32 %v447
    %vm455 = vmor %vm453, %vm454
    %v456 = vsel %vm455, %v447, %v452
    %v457 = vmul.f32 %v440, %v456
    %458 = vst [vmem:[#allocation2] sm:$0x3] %v457
    // Predicated region
    $region18: #{tpu_custom_call.1} parent=1 // pred_check
      _
    $region19: #{tpu_custom_call.1} parent=1 // pred_check_branch
      %460 = sbr.rel (0) target = $region21
    $region20: #{tpu_custom_call.1} parent=1 // pred_region
      %462 = vsyncadd [#allocation3], 0
      %s464 = sshll.u32 [#allocation2], 4
      %s465 = int_to_ptr.vmem [resolvable:$true] %s464
      %s466 = sshll.u32 %s4, 4
      %s467 = int_to_ptr.hbm [resolvable:$true] %s466
      %469 = dma.vmem_to_hbm [thread:$0]  %s465, 32, %s467, [#allocation3]
    $region21: #{tpu_custom_call.1} parent=1 // pred_fallthru
      _
    // Predicated region
    $region22: #{tpu_custom_call.1} parent=1 // pred_check
      _
    $region23: #{tpu_custom_call.1} parent=1 // pred_check_branch
      %471 = sbr.rel (0) target = $region25
    $region24: #{tpu_custom_call.1} parent=1 // pred_region
      %473 = dma.done [#allocation3], 32
    $region25: #{tpu_custom_call.1} parent=1 // pred_fallthru
      _
    %474 = vsyncpa [#allocation3], 1

</llo_original>
